<compile_context>
chip_gen: v6e
topology: v6e:2x2x1
jax: 0.10.0
libtpu: 0.0.40
codegen_flags: <defaults>
</compile_context>

<pallas_src>
import functools
import numpy as np
import jax
import jax.numpy as jnp
from jax.experimental import pallas as pl
from jax.experimental.pallas import tpu as pltpu


def _round_up(x, m):
    return -(-x // m) * m


def get_same_padding(spatial_shape, kernel_size, stride, dilation=(1, 1)):
    """Replicates getSAMEPadding() for non-transposed convs (TF 'SAME')."""
    spatial = np.asarray(spatial_shape)
    k = np.asarray(kernel_size)
    s = np.asarray(stride)
    d = np.asarray(dilation)
    out = (spatial + s - 1) // s
    pad_in = np.maximum(0, (out - 1) * s + (k - 1) * d + 1 - spatial)
    odd = pad_in % 2 != 0
    sym = tuple(int(p) for p in (pad_in // 2))
    unsym = [y for x in odd for y in [0, int(x)]]
    return sym, unsym


def _wn_conv_kernel(x_ref, w_ref, b_ref, o_ref, patch_ref, *,
                    KH, KW, CIN_PAD, WP, BBLK, L_COL):
    # x_ref    : (BBLK, CIN_PAD, L)          flat SAME-padded images, channels
    #                                        zero-padded to a multiple of 8
    # w_ref    : (Cout, KH*KW*CIN_PAD)       pre-normalized bf16 weights,
    #                                        K ordered (kh, kw, ci)
    # b_ref    : (Cout, 1)                   f32 bias
    # o_ref    : (Cout, BBLK*L_COL)          "rolled" output; image bb occupies
    #                                        columns [bb*L_COL, bb*L_COL+Ho*Wp)
    # patch_ref: (KH*KW*CIN_PAD, BBLK*L_COL) bf16 im2col scratch (VMEM)
    L = x_ref.shape[-1]
    for bb in range(BBLK):                       # static unroll
        row = x_ref[bb]                          # (CIN_PAD, L): ONE load / image
        col0 = bb * L_COL
        for kh in range(KH):
            for kw in range(KW):
                s = kh * WP + kw
                # pltpu.roll follows jnp.roll semantics (out[i] = in[(i-shift)%L]),
                # so shift = L - s gives out[i] = in[i + s] for i + s < L; the
                # wrapper guarantees L >= s_max + Ho*Wp, so the valid columns
                # never wrap.  XLU lane rotation instead of misaligned loads.
                tap = row if s == 0 else pltpu.roll(row, shift=L - s, axis=1)
                r0 = (kh * KW + kw) * CIN_PAD    # sublane-aligned group offset
                patch_ref[r0:r0 + CIN_PAD, col0:col0 + L_COL] = (
                    tap[:, :L_COL].astype(patch_ref.dtype))
    # Single bf16 x bf16 MXU dot with f32 accumulation; bias broadcast on lanes.
    acc = jnp.dot(w_ref[...], patch_ref[...], preferred_element_type=jnp.float32)
    o_ref[...] = (acc + b_ref[...]).astype(o_ref.dtype)


def conv2d_weightnorm_same(x_nchw, weight_v, g, bias):
    """SAME-padded, weight-normalized Conv2d (stride 1) via a Pallas kernel."""
    B, Cin, H, W = x_nchw.shape
    Cout, Cin2, KH, KW = weight_v.shape
    assert Cin == Cin2
    # TODO(synk): stride > 1 and transposed convolutions are not implemented in
    # the Pallas path (this script instantiates a stride-1 Conv2d).
    sym, unsym = get_same_padding((H, W), (KH, KW), (1, 1))
    # F.pad(x, unsym) followed by the conv's symmetric padding, folded into one
    # zero pad.  NOTE: the index convention matches F.pad verbatim (unsym[0:2]
    # pad the LAST axis = width, unsym[2:4] pad height), i.e. the original
    # module's quirk of padding W by H's oddness (and vice versa) is reproduced
    # faithfully; at the even-padding shapes used here unsym is all zeros.
    pad_top, pad_bot = sym[0] + unsym[2], sym[0] + unsym[3]
    pad_lef, pad_rig = sym[1] + unsym[0], sym[1] + unsym[1]
    Hp, Wp = H + pad_top + pad_bot, W + pad_lef + pad_rig
    Ho, Wo = Hp - KH + 1, Wp - KW + 1

    L_TAP = Ho * Wp                       # valid columns per image (rolled conv)
    s_max = (KH - 1) * Wp + (KW - 1)      # largest tap shift
    L_COL = _round_up(L_TAP, 128)         # per-image lane stride (aligned stores)
    L = _round_up(max(Hp * Wp, s_max + L_TAP), 128)   # flat image length
    CIN_PAD = _round_up(Cin, 8)           # sublane-aligned channel groups
    K_PAD = KH * KW * CIN_PAD

    # Batch folding: bblk images per grid step on the GEMM's lane axis.  Keep
    # >= 2 grid blocks when B >= 2 so v7x's two TensorCores both get work, and
    # cap the folded lane width to bound the patch scratch VMEM.
    bblk = min(max(1, 2048 // L_COL), max(1, -(-B // 2)))
    nblocks = -(-B // bblk)
    Bpad = nblocks * bblk

    xp = jnp.pad(x_nchw, ((0, Bpad - B), (0, CIN_PAD - Cin),
                          (pad_top, pad_bot), (pad_lef, pad_rig)))
    xf = xp.reshape(Bpad, CIN_PAD, Hp * Wp)            # free row-major flatten
    xf = jnp.pad(xf, ((0, 0), (0, 0), (0, L - Hp * Wp)))

    # Weight normalization hoisted out of the per-block grid (grid-invariant).
    # NOTE: no eps inside the norm -- matches torch.nn.utils.weight_norm.
    v = weight_v.astype(jnp.float32)
    norm = jnp.sqrt(jnp.sum(v * v, axis=(1, 2, 3), keepdims=True))
    w = v * (g.reshape(Cout, 1, 1, 1).astype(jnp.float32) / norm)
    w = jnp.pad(w, ((0, 0), (0, CIN_PAD - Cin), (0, 0), (0, 0)))  # zero pad rows
    # K ordered (kh, kw, ci) to match the im2col rows; bf16 MXU operand.
    w2 = jnp.transpose(w, (0, 2, 3, 1)).reshape(Cout, K_PAD).astype(jnp.bfloat16)
    b2 = bias.reshape(Cout, 1).astype(jnp.float32)

    kernel = functools.partial(_wn_conv_kernel, KH=KH, KW=KW, CIN_PAD=CIN_PAD,
                               WP=Wp, BBLK=bblk, L_COL=L_COL)
    # TODO(synk): for much larger H*W / Cin the per-step block must become
    # spatial row tiles with a (KH-1)-row halo, budgeted against v7x's 64 MiB
    # physical / 32 MiB scoped-default VMEM (patch scratch is
    # K_PAD*bblk*L_COL*2 bytes and BlockSpec double-buffers every input block),
    # with vmem_limit_bytes set explicitly; unnecessary at these shapes.
    out = pl.pallas_call(
        kernel,
        out_shape=jax.ShapeDtypeStruct((nblocks, Cout, bblk * L_COL),
                                       x_nchw.dtype),
        grid=(nblocks,),
        in_specs=[
            pl.BlockSpec((bblk, CIN_PAD, L), lambda i: (i, 0, 0)),
            pl.BlockSpec((Cout, K_PAD), lambda i: (0, 0)),
            pl.BlockSpec((Cout, 1), lambda i: (0, 0)),
        ],
        out_specs=pl.BlockSpec((None, Cout, bblk * L_COL), lambda i: (i, 0, 0)),
        scratch_shapes=[pltpu.VMEM((K_PAD, bblk * L_COL), jnp.bfloat16)],
        compiler_params=pltpu.CompilerParams(dimension_semantics=("parallel",)),
    )(xf, w2, b2)

    # Un-fold: column bb*L_COL + h*Wp + w of grid block i is output pixel (h,w)
    # of image i*bblk + bb (valid for w < Wo); padded/garbage columns sliced.
    y = out.reshape(nblocks, Cout, bblk, L_COL)
    y = jnp.moveaxis(y, 2, 1).reshape(Bpad, Cout, L_COL)   # no-op when bblk == 1
    y = y[:B, :, :L_TAP].reshape(B, Cout, Ho, Wp)[:, :, :, :Wo]
    return y


def padded_normed_conv_forward(x, weight_v, init_scale=0.01, eps=1e-8):
    """First forward() call: weight-norm data-dependent init, then the conv."""
    Cout = weight_v.shape[0]
    g0 = jnp.ones((Cout,), jnp.float32)        # weight_g initialised to 1
    b0 = jnp.zeros((Cout,), jnp.float32)       # bias initialised to 0
    # init_parameters(): run the conv once and compute per-channel stats.
    y0 = conv2d_weightnorm_same(x, weight_v, g0, b0)
    # TODO(synk): the per-channel sum / sum-of-squares below could be fused into
    # the kernel as extra accumulator outputs over an "arbitrary" batch axis to
    # save one HBM round-trip over y0; negligible at 16x16 so done in XLA here.
    m_init = jnp.mean(y0, axis=(0, 2, 3))
    v_init = jnp.var(y0, axis=(0, 2, 3), ddof=1)     # torch.var is unbiased
    scale_init = init_scale / jnp.sqrt(v_init + eps)
    g1 = g0 * scale_init
    b1 = b0 - m_init * scale_init
    # forward() then applies the re-initialized conv.  Since g0=1, b0=0 and the
    # conv is linear in (weight, bias), that conv equals an exact per-channel
    # affine rescale of y0 -- no second kernel launch needed.
    y = scale_init[None, :, None, None] * (y0 - m_init[None, :, None, None])
    return y, (g1, b1)


def _reference(x, weight_v, g, bias):
    """Pure-JAX reference (XLA conv) for a sanity check."""
    B, Cin, H, W = x.shape
    Cout, _, KH, KW = weight_v.shape
    sym, unsym = get_same_padding((H, W), (KH, KW), (1, 1))
    xp = jnp.pad(x, ((0, 0), (0, 0), (unsym[2], unsym[3]), (unsym[0], unsym[1])))
    xp = jnp.pad(xp, ((0, 0), (0, 0), (sym[0], sym[0]), (sym[1], sym[1])))
    norm = jnp.sqrt(jnp.sum(weight_v * weight_v, axis=(1, 2, 3), keepdims=True))
    w = weight_v * (g[:, None, None, None] / norm)
    y = jax.lax.conv_general_dilated(
        xp, w, window_strides=(1, 1), padding='VALID',
        dimension_numbers=('NCHW', 'OIHW', 'NCHW'))
    return y + bias[None, :, None, None]


if __name__ == "__main__":
    key = jax.random.PRNGKey(0)
    B, Cin, H, W = 2, 4, 16, 16
    Cout, KH, KW = 8, 3, 3

    kx, kw = jax.random.split(key)
    x = jax.random.normal(kx, (B, Cin, H, W), dtype=jnp.float32)
    # weight_v.data.normal_(mean=0, std=0.05) from init_parameters()
    weight_v = 0.05 * jax.random.normal(kw, (Cout, Cin, KH, KW), dtype=jnp.float32)

    y, (g1, b1) = padded_normed_conv_forward(x, weight_v)
    y = jax.block_until_ready(y)
    assert y.shape == (B, Cout, H, W), y.shape

    y_ref = jax.block_until_ready(_reference(x, weight_v, g1, b1))
    # Tolerance sized for bf16 MXU operands with f32 accumulation (values are
    # O(0.01-0.05) after the data-dependent init scale, so this still catches
    # any structural error, which would be ~100x larger).
    np.testing.assert_allclose(np.asarray(y), np.asarray(y_ref),
                               rtol=2e-3, atol=5e-4)
    print("KERNEL_OK")
</pallas_src>

<mosaic_0001>
module attributes {stable_mosaic.version = 11 : i64} {
  func.func @_wn_conv_kernel(%arg0: i32, %arg1: memref<1x8x384xf32, #tpu.memory_space<vmem>>, %arg2: memref<8x72xbf16, #tpu.memory_space<vmem>>, %arg3: memref<8x1xf32, #tpu.memory_space<vmem>>, %arg4: memref<1x8x384xf32, #tpu.memory_space<vmem>>, %arg5: memref<72x384xbf16, #tpu.memory_space<vmem>>) attributes {dimension_semantics = [#tpu.dimension_semantics<parallel>], iteration_bounds = array<i64: 2>, scalar_prefetch = 0 : i64, scratch_operands = 1 : i64, tpu.core_type = #tpu.core_type<tc>, window_params = [{transform_indices = @transform_0, window_bounds = array<i64: 1, 8, 384>}, {pipeline_mode = #tpu.pipeline_mode<synchronous>, transform_indices = @transform_1, window_bounds = array<i64: 8, 72>}, {pipeline_mode = #tpu.pipeline_mode<synchronous>, transform_indices = @transform_2, window_bounds = array<i64: 8, 1>}, {transform_indices = @transform_3, window_bounds = array<i64: 1, 8, 384>}]} {
    %c0 = arith.constant 0 : index
    %c0_0 = arith.constant 0 : index
    %c0_1 = arith.constant 0 : index
    %0 = vector.load %arg1[%c0, %c0_0, %c0_1] : memref<1x8x384xf32, #tpu.memory_space<vmem>>, vector<1x8x384xf32>
    %1 = vector.shape_cast %0 : vector<1x8x384xf32> to vector<8x384xf32>
    %2 = arith.truncf %1 : vector<8x384xf32> to vector<8x384xbf16>
    %c0_2 = arith.constant 0 : index
    %c0_3 = arith.constant 0 : index
    %3 = vector.load %arg5[%c0_2, %c0_3] : memref<72x384xbf16, #tpu.memory_space<vmem>>, vector<8x384xbf16>
    tpu.vector_store %arg5[%c0_2, %c0_3], %2 {strides = array<i32>} : memref<72x384xbf16, #tpu.memory_space<vmem>>, vector<8x384xbf16>,
    %c383_i32 = arith.constant 383 : i32
    %4 = tpu.dynamic_rotate %1 by %c383_i32 dim 1 : vector<8x384xf32>, i32 -> vector<8x384xf32>
    %5 = arith.truncf %4 : vector<8x384xf32> to vector<8x384xbf16>
    %c8 = arith.constant 8 : index
    %c0_4 = arith.constant 0 : index
    %6 = vector.load %arg5[%c8, %c0_4] : memref<72x384xbf16, #tpu.memory_space<vmem>>, vector<8x384xbf16>
    tpu.vector_store %arg5[%c8, %c0_4], %5 {strides = array<i32>} : memref<72x384xbf16, #tpu.memory_space<vmem>>, vector<8x384xbf16>,
    %c382_i32 = arith.constant 382 : i32
    %7 = tpu.dynamic_rotate %1 by %c382_i32 dim 1 : vector<8x384xf32>, i32 -> vector<8x384xf32>
    %8 = arith.truncf %7 : vector<8x384xf32> to vector<8x384xbf16>
    %c16 = arith.constant 16 : index
    %c0_5 = arith.constant 0 : index
    %9 = vector.load %arg5[%c16, %c0_5] : memref<72x384xbf16, #tpu.memory_space<vmem>>, vector<8x384xbf16>
    tpu.vector_store %arg5[%c16, %c0_5], %8 {strides = array<i32>} : memref<72x384xbf16, #tpu.memory_space<vmem>>, vector<8x384xbf16>,
    %c366_i32 = arith.constant 366 : i32
    %10 = tpu.dynamic_rotate %1 by %c366_i32 dim 1 : vector<8x384xf32>, i32 -> vector<8x384xf32>
    %11 = arith.truncf %10 : vector<8x384xf32> to vector<8x384xbf16>
    %c24 = arith.constant 24 : index
    %c0_6 = arith.constant 0 : index
    %12 = vector.load %arg5[%c24, %c0_6] : memref<72x384xbf16, #tpu.memory_space<vmem>>, vector<8x384xbf16>
    tpu.vector_store %arg5[%c24, %c0_6], %11 {strides = array<i32>} : memref<72x384xbf16, #tpu.memory_space<vmem>>, vector<8x384xbf16>,
    %c365_i32 = arith.constant 365 : i32
    %13 = tpu.dynamic_rotate %1 by %c365_i32 dim 1 : vector<8x384xf32>, i32 -> vector<8x384xf32>
    %14 = arith.truncf %13 : vector<8x384xf32> to vector<8x384xbf16>
    %c32 = arith.constant 32 : index
    %c0_7 = arith.constant 0 : index
    %15 = vector.load %arg5[%c32, %c0_7] : memref<72x384xbf16, #tpu.memory_space<vmem>>, vector<8x384xbf16>
    tpu.vector_store %arg5[%c32, %c0_7], %14 {strides = array<i32>} : memref<72x384xbf16, #tpu.memory_space<vmem>>, vector<8x384xbf16>,
    %c364_i32 = arith.constant 364 : i32
    %16 = tpu.dynamic_rotate %1 by %c364_i32 dim 1 : vector<8x384xf32>, i32 -> vector<8x384xf32>
    %17 = arith.truncf %16 : vector<8x384xf32> to vector<8x384xbf16>
    %c40 = arith.constant 40 : index
    %c0_8 = arith.constant 0 : index
    %18 = vector.load %arg5[%c40, %c0_8] : memref<72x384xbf16, #tpu.memory_space<vmem>>, vector<8x384xbf16>
    tpu.vector_store %arg5[%c40, %c0_8], %17 {strides = array<i32>} : memref<72x384xbf16, #tpu.memory_space<vmem>>, vector<8x384xbf16>,
    %c348_i32 = arith.constant 348 : i32
    %19 = tpu.dynamic_rotate %1 by %c348_i32 dim 1 : vector<8x384xf32>, i32 -> vector<8x384xf32>
    %20 = arith.truncf %19 : vector<8x384xf32> to vector<8x384xbf16>
    %c48 = arith.constant 48 : index
    %c0_9 = arith.constant 0 : index
    %21 = vector.load %arg5[%c48, %c0_9] : memref<72x384xbf16, #tpu.memory_space<vmem>>, vector<8x384xbf16>
    tpu.vector_store %arg5[%c48, %c0_9], %20 {strides = array<i32>} : memref<72x384xbf16, #tpu.memory_space<vmem>>, vector<8x384xbf16>,
    %c347_i32 = arith.constant 347 : i32
    %22 = tpu.dynamic_rotate %1 by %c347_i32 dim 1 : vector<8x384xf32>, i32 -> vector<8x384xf32>
    %23 = arith.truncf %22 : vector<8x384xf32> to vector<8x384xbf16>
    %c56 = arith.constant 56 : index
    %c0_10 = arith.constant 0 : index
    %24 = vector.load %arg5[%c56, %c0_10] : memref<72x384xbf16, #tpu.memory_space<vmem>>, vector<8x384xbf16>
    tpu.vector_store %arg5[%c56, %c0_10], %23 {strides = array<i32>} : memref<72x384xbf16, #tpu.memory_space<vmem>>, vector<8x384xbf16>,
    %c346_i32 = arith.constant 346 : i32
    %25 = tpu.dynamic_rotate %1 by %c346_i32 dim 1 : vector<8x384xf32>, i32 -> vector<8x384xf32>
    %26 = arith.truncf %25 : vector<8x384xf32> to vector<8x384xbf16>
    %c64 = arith.constant 64 : index
    %c0_11 = arith.constant 0 : index
    %27 = vector.load %arg5[%c64, %c0_11] : memref<72x384xbf16, #tpu.memory_space<vmem>>, vector<8x384xbf16>
    tpu.vector_store %arg5[%c64, %c0_11], %26 {strides = array<i32>} : memref<72x384xbf16, #tpu.memory_space<vmem>>, vector<8x384xbf16>,
    %c0_12 = arith.constant 0 : index
    %c0_13 = arith.constant 0 : index
    %28 = vector.load %arg2[%c0_12, %c0_13] : memref<8x72xbf16, #tpu.memory_space<vmem>>, vector<8x72xbf16>
    %c0_14 = arith.constant 0 : index
    %c0_15 = arith.constant 0 : index
    %29 = vector.load %arg5[%c0_14, %c0_15] : memref<72x384xbf16, #tpu.memory_space<vmem>>, vector<72x384xbf16>
    %cst = arith.constant dense<0.000000e+00> : vector<8x384xf32>
    %30 = tpu.matmul %28, %29, %cst {dimension_numbers = #tpu.dot_dimension_numbers<[1], [0], [0], [1], [0, 0, 1, 1], [], []>} : vector<8x72xbf16>, vector<72x384xbf16>, vector<8x384xf32> -> vector<8x384xf32>
    %c0_16 = arith.constant 0 : index
    %c0_17 = arith.constant 0 : index
    %31 = vector.load %arg3[%c0_16, %c0_17] : memref<8x1xf32, #tpu.memory_space<vmem>>, vector<8x1xf32>
    %32 = vector.broadcast %31 : vector<8x1xf32> to vector<8x384xf32>
    %33 = arith.addf %30, %32 : vector<8x384xf32>
    %c0_18 = arith.constant 0 : index
    %c0_19 = arith.constant 0 : index
    %c0_20 = arith.constant 0 : index
    %34 = vector.load %arg4[%c0_18, %c0_19, %c0_20] : memref<1x8x384xf32, #tpu.memory_space<vmem>>, vector<1x8x384xf32>
    %35 = vector.shape_cast %34 : vector<1x8x384xf32> to vector<8x384xf32>
    %36 = vector.shape_cast %33 : vector<8x384xf32> to vector<1x8x384xf32>
    tpu.vector_store %arg4[%c0_18, %c0_19, %c0_20], %36 {strides = array<i32>} : memref<1x8x384xf32, #tpu.memory_space<vmem>>, vector<1x8x384xf32>,
    return
  }
  func.func @transform_0(%arg0: i32) -> (i32, i32, i32) {
    %c0_i32 = arith.constant 0 : i32
    %c0_i32_0 = arith.constant 0 : i32
    %c0_i32_1 = arith.constant 0 : i32
    return %arg0, %c0_i32, %c0_i32_0 : i32, i32, i32
  }
  func.func @transform_1(%arg0: i32) -> (i32, i32) {
    %c0_i32 = arith.constant 0 : i32
    %c0_i32_0 = arith.constant 0 : i32
    %c0_i32_1 = arith.constant 0 : i32
    return %c0_i32, %c0_i32_0 : i32, i32
  }
  func.func @transform_2(%arg0: i32) -> (i32, i32) {
    %c0_i32 = arith.constant 0 : i32
    %c0_i32_0 = arith.constant 0 : i32
    %c0_i32_1 = arith.constant 0 : i32
    return %c0_i32, %c0_i32_0 : i32, i32
  }
  func.func @transform_3(%arg0: i32) -> (i32, i32, i32) {
    %c0_i32 = arith.constant 0 : i32
    %c0_i32_0 = arith.constant 0 : i32
    %c0_i32_1 = arith.constant 0 : i32
    return %arg0, %c0_i32, %c0_i32_0 : i32, i32, i32
  }
}

</mosaic_0001>

<llo_original>
// kernel: tpu_custom_call.1
$region0: #{tpu_custom_call.1}
  #allocation0 [shape = 'u32[]', space=smem, size = 0x4, offset = 0x4, fixed_abs, tag = 'smem constant byte address 0x4 - core index']
  #allocation1 [shape = 'u32[144,128]{1,0:T(1,128)}', space=vmem, size = 0x12000, scoped, tag = 'internal scratch']
  #allocation2 [shape = 'bf16[72,384]{1,0:T(8,128)(2,1)}', space=vmem, size = 0xd800, scoped, tag = 'scratch operand']
  %s0 = inlined_call_operand.hbm [shape: f32[2,8,384], index: 0, kind: input, shape index: {}]
  %s1 = inlined_call_operand.vmem [shape: bf16[8,72], index: 1, kind: input, shape index: {}]
  %s2 = inlined_call_operand.vmem [shape: f32[8,1], index: 2, kind: input, shape index: {}]
  %s3 = inlined_call_operand.hbm [shape: f32[2,8,384], index: 3, kind: output, shape index: {}]
  %s4 = sld [smem:[#allocation0]]
  $region49: #{tpu_custom_call.1} parent=0
    _
  %s6 = ssub.s32 1, %s4
  %s7 = scalar_select 0, %s6, %s4
  $region1: #{tpu_custom_call.1} parent=0
    #allocation3 [shape = 'u8[24576]{0}', space=vmem, size = 0x6000, scoped, tag = 'input window, operand 0']
    #allocation4 [shape = 's32[2]{0}', space=sflag, size = 0x8, scoped, tag = 'scoped memory for tpu_custom_call.1']
    #allocation5 [shape = 's32[2]{0}', space=sflag, size = 0x8, scoped, tag = 'scoped memory for tpu_custom_call.1']
    #allocation6 [shape = 'u8[24576]{0}', space=vmem, size = 0x6000, scoped, tag = 'output window, operand 0']
    %8 = vsyncpa [#allocation4], 0
    %s9 = scalar_lea.sflag [#allocation4], 1
    %10 = vsyncpa %s9, 0
    %11 = vsyncpa [#allocation5], 0
    %s12 = scalar_lea.sflag [#allocation5], 1
    %13 = vsyncpa %s12, 0
    loop: start=0, step=1, limit=4
    $region2: #{tpu_custom_call.1} parent=1 // loop_pre_header
      _
    $region3: #{tpu_custom_call.1} parent=1 // loop_header
      %s15 = sphi 0, %s19
      %p16 = scmp.ge.s32.totalorder %s15, 4
      %s25 = sphi 0, %s27
      %s28 = sphi 0, %s25
      %s29 = sphi 0, %s28
      %s45 = sphi 0, %s29
      %s49 = sphi 0, %s49
      %s51 = sphi 0, %s49
      %s52 = sphi 0, %s51
      %s66 = sphi 0, %s52
      %s70 = sphi 0, %s70
      %s72 = sphi 0, %s70
      %s73 = sphi 0, %s72
      %s87 = sphi 0, %s73
      %s93 = sphi 0, %s95
      %s96 = sphi 0, %s93
      %s97 = sphi 0, %s96
      %s113 = sphi 0, %s97
    $region4: #{tpu_custom_call.1} parent=1 // loop_header_branch
      %18 = sbr.rel (%p16) target = $region8
    $region5: #{tpu_custom_call.1} parent=1 // loop_body
      %s20 = ssub.s32 %s15, 1
      %s21 = ssub.s32 %s15, 2
      %s22 = sadd.s32 %s15, 1
      %s23 = ssub.s32 %s15, %s22
      %p24 = scmp.eq.s32.totalorder %s23, 0
      %s26 = sadd.s32 %s25, 1
      %s27 = scalar_select %p24, %s25, %s26
      %p30 = pneg %p24
      %p31 = scmp.eq.s32.totalorder %s15, 1
      %p32 = por %p30, %p31
      %p33 = scmp.ne.s32.totalorder %s25, %s28
      %p34 = scmp.eq.s32.totalorder %s15, 0
      %p35 = por %p33, %p34
      %p36 = scmp.ne.s32.totalorder %s25, %s28
      %p37 = scmp.eq.s32.totalorder %s20, 1
      %p38 = por %p36, %p37
      %p39 = scmp.ne.s32.totalorder %s28, %s29
      %p40 = scmp.eq.s32.totalorder %s20, 0
      %p41 = por %p39, %p40
      %p42 = scmp.ne.s32.totalorder %s28, %s29
      %p43 = scmp.eq.s32.totalorder %s21, 1
      %p44 = por %p42, %p43
      %p46 = scmp.ne.s32.totalorder %s29, %s45
      %p47 = scmp.eq.s32.totalorder %s21, 0
      %p48 = por %p46, %p47
      %s50 = sadd.s32 %s49, 1
      %p53 = scmp.eq.s32.totalorder %s15, 1
      %p54 = scmp.ne.s32.totalorder %s49, %s51
      %p55 = scmp.eq.s32.totalorder %s15, 0
      %p56 = por %p54, %p55
      %p57 = scmp.ne.s32.totalorder %s49, %s51
      %p58 = scmp.eq.s32.totalorder %s20, 1
      %p59 = por %p57, %p58
      %p60 = scmp.ne.s32.totalorder %s51, %s52
      %p61 = scmp.eq.s32.totalorder %s20, 0
      %p62 = por %p60, %p61
      %p63 = scmp.ne.s32.totalorder %s51, %s52
      %p64 = scmp.eq.s32.totalorder %s21, 1
      %p65 = por %p63, %p64
      %p67 = scmp.ne.s32.totalorder %s52, %s66
      %p68 = scmp.eq.s32.totalorder %s21, 0
      %p69 = por %p67, %p68
      %s71 = sadd.s32 %s70, 1
      %p74 = scmp.eq.s32.totalorder %s15, 1
      %p75 = scmp.ne.s32.totalorder %s70, %s72
      %p76 = scmp.eq.s32.totalorder %s15, 0
      %p77 = por %p75, %p76
      %p78 = scmp.ne.s32.totalorder %s70, %s72
      %p79 = scmp.eq.s32.totalorder %s20, 1
      %p80 = por %p78, %p79
      %p81 = scmp.ne.s32.totalorder %s72, %s73
      %p82 = scmp.eq.s32.totalorder %s20, 0
      %p83 = por %p81, %p82
      %p84 = scmp.ne.s32.totalorder %s72, %s73
      %p85 = scmp.eq.s32.totalorder %s21, 1
      %p86 = por %p84, %p85
      %p88 = scmp.ne.s32.totalorder %s73, %s87
      %p89 = scmp.eq.s32.totalorder %s21, 0
      %p90 = por %p88, %p89
      %s91 = ssub.s32 %s15, %s22
      %p92 = scmp.eq.s32.totalorder %s91, 0
      %s94 = sadd.s32 %s93, 1
      %s95 = scalar_select %p92, %s93, %s94
      %p98 = pneg %p92
      %p99 = scmp.eq.s32.totalorder %s15, 1
      %p100 = por %p98, %p99
      %p101 = scmp.ne.s32.totalorder %s93, %s96
      %p102 = scmp.eq.s32.totalorder %s15, 0
      %p103 = por %p101, %p102
      %p104 = scmp.ne.s32.totalorder %s93, %s96
      %p105 = scmp.eq.s32.totalorder %s20, 1
      %p106 = por %p104, %p105
      %p107 = scmp.ne.s32.totalorder %s96, %s97
      %p108 = scmp.eq.s32.totalorder %s20, 0
      %p109 = por %p107, %p108
      %p110 = scmp.ne.s32.totalorder %s96, %s97
      %p111 = scmp.eq.s32.totalorder %s21, 1
      %p112 = por %p110, %p111
      %p114 = scmp.ne.s32.totalorder %s97, %s113
      %p115 = scmp.eq.s32.totalorder %s21, 0
      %p116 = por %p114, %p115
      %p117 = scmp.le.s32.totalorder 1, %s15
      %p118 = scmp.lt.s32.totalorder %s15, 3
      %p119 = pnand %p117, %p118
      %p120 = pneg %p119
      // Predicated region
      $region9: #{tpu_custom_call.1} parent=5 // pred_check
        _
      $region10: #{tpu_custom_call.1} parent=5 // pred_check_branch
        %122 = sbr.rel (%p119) target = $region12
      $region11: #{tpu_custom_call.1} parent=5 // pred_region
        %s123 = ssub.s32 %s15, 1
        // Predicated region
        $region13: #{tpu_custom_call.1} parent=11 // pred_check
          %p124 = pneg %p62
        $region14: #{tpu_custom_call.1} parent=11 // pred_check_branch
          %126 = sbr.rel (%p124) target = $region16
        $region15: #{tpu_custom_call.1} parent=11 // pred_region
          _
        $region16: #{tpu_custom_call.1} parent=11 // pred_fallthru
          _
        // Predicated region
        $region17: #{tpu_custom_call.1} parent=11 // pred_check
          %p127 = pneg %p83
        $region18: #{tpu_custom_call.1} parent=11 // pred_check_branch
          %129 = sbr.rel (%p127) target = $region20
        $region19: #{tpu_custom_call.1} parent=11 // pred_region
          _
        $region20: #{tpu_custom_call.1} parent=11 // pred_fallthru
          _
      $region12: #{tpu_custom_call.1} parent=5 // pred_fallthru
        _
      %p130 = scmp.lt.s32.totalorder %s15, 2
      // Predicated region
      $region21: #{tpu_custom_call.1} parent=5 // pred_check
        %p131 = pneg %p130
      $region22: #{tpu_custom_call.1} parent=5 // pred_check_branch
        %133 = sbr.rel (%p131) target = $region24
      $region23: #{tpu_custom_call.1} parent=5 // pred_region
        // Predicated region
        $region25: #{tpu_custom_call.1} parent=23 // pred_check
          %p134 = pneg %p35
        $region26: #{tpu_custom_call.1} parent=23 // pred_check_branch
          %136 = sbr.rel (%p134) target = $region28
        $region27: #{tpu_custom_call.1} parent=23 // pred_region
          %s137 = sand.u32 %s25, 1
          %s138 = scalar_lea.sflag [#allocation4], %s137
          %s139 = sand.u32 %s25, 1
          %s140 = smul.addr %s139, 24
          %s141 = scalar_lea.vmem [#allocation3], %s140
          %s143 = ssub.s32 384, 384
          %144 = vsyncadd %s138, %s143
          %s145 = smul.addr %s15, 3
          %s146 = smul.addr %s145, 128
          %s147 = scalar_lea.hbm %s0, %s146
          %s149 = sshll.u32 %s141, 4
          %s150 = int_to_ptr.vmem [resolvable:$true] %s149
          %152 = dma.hbm_to_vmem [thread:$0]  %s147, 384, %s150, %s138
        $region28: #{tpu_custom_call.1} parent=23 // pred_fallthru
          _
      $region24: #{tpu_custom_call.1} parent=5 // pred_fallthru
        _
      %p153 = scmp.le.s32.totalorder 1, %s15
      %p154 = scmp.lt.s32.totalorder %s15, 3
      %p155 = pnand %p153, %p154
      %p156 = pneg %p155
      // Predicated region
      $region29: #{tpu_custom_call.1} parent=5 // pred_check
        _
      $region30: #{tpu_custom_call.1} parent=5 // pred_check_branch
        %158 = sbr.rel (%p155) target = $region32
      $region31: #{tpu_custom_call.1} parent=5 // pred_region
        %s159 = ssub.s32 %s15, 1
        %s160 = sand.u32 %s28, 1
        %s161 = scalar_lea.sflag [#allocation4], %s160
        %s162 = sand.u32 %s28, 1
        %s163 = smul.addr %s162, 24
        %s164 = scalar_lea.vmem [#allocation3], %s163
        // Predicated region
        $region33: #{tpu_custom_call.1} parent=31 // pred_check
          %p165 = pneg %p41
        $region34: #{tpu_custom_call.1} parent=31 // pred_check_branch
          %167 = sbr.rel (%p165) target = $region36
        $region35: #{tpu_custom_call.1} parent=31 // pred_region
          %168 = dma.done %s161, 384
        $region36: #{tpu_custom_call.1} parent=31 // pred_fallthru
          _
        %s169 = sand.u32 %s28, 1
        %s170 = scalar_lea.sflag [#allocation4], %s169
        %s171 = sand.u32 %s28, 1
        %s172 = smul.addr %s171, 24
        %s173 = scalar_lea.vmem [#allocation3], %s172
        %p174 = pneg %p41
        %p175 = pneg %p38
        %p176 = pneg %p62
        %p177 = pneg %p59
        %p178 = pneg %p83
        %p179 = pneg %p80
        %p180 = pneg %p109
        %p181 = pneg %p106
        %s182 = sand.u32 %s96, 1
        %s183 = scalar_lea.sflag [#allocation5], %s182
        %s184 = sand.u32 %s96, 1
        %s185 = smul.addr %s184, 24
        %s186 = scalar_lea.vmem [#allocation6], %s185
        %v188 = vld [vmem:[%s164] sm:$0xff]
        %v189 = vld [vmem:[%s164 + $0x8] sm:$0xff]
        %v190 = vld [vmem:[%s164 + $0x10] sm:$0xff]
        %v191 = vpack.c.bf16 %v188, %v188
        %v192 = vpack.c.bf16 %v189, %v189
        %v193 = vpack.c.bf16 %v190, %v190
        %v197 = vunpack.c.l.b16 %v191
        %v198 = vunpack.c.l.b16 %v192
        %v199 = vunpack.c.l.b16 %v193
        %v200 = vpack.c.b16 %v198, %v197
        %v201 = vpack.c.b16 %v199, %v199
        %204 = vst [vmem:[#allocation2] sm:$0xff] %v200
        %205 = vst [vmem:[#allocation2 + $0x8] sm:$0xf] %v201
        %206 = vrot.lane.b32.xlu0 %v188, 127
        %v207 = vpop.permute.xlu0 %206
        %208 = vrot.lane.b32.xlu0 %v189, 127
        %v209 = vpop.permute.xlu0 %208
        %210 = vrot.lane.b32.xlu0 %v190, 127
        %v211 = vpop.permute.xlu0 %210
        %v212 = vlaneseq
        %v213 = vand.u32 %v212, 127
        %vm214 = vcmp.lt.s32.totalorder %v213, 127
        %v215 = vsel %vm214, %v209, %v211
        %v216 = vsel %vm214, %v207, %v209
        %v217 = vsel %vm214, %v211, %v207
        %v218 = vpack.c.bf16 %v216, %v216
        %v219 = vpack.c.bf16 %v215, %v215
        %v220 = vpack.c.bf16 %v217, %v217
        %v224 = vunpack.c.l.b16 %v218
        %v225 = vunpack.c.l.b16 %v219
        %v226 = vunpack.c.l.b16 %v220
        %v227 = vpack.c.b16 %v225, %v224
        %v228 = vpack.c.b16 %v226, %v226
        %231 = vst [vmem:[#allocation2 + $0xc] sm:$0xff] %v227
        %232 = vst [vmem:[#allocation2 + $0x14] sm:$0xf] %v228
        %233 = vrot.lane.b32.xlu0 %v188, 126
        %v234 = vpop.permute.xlu0 %233
        %235 = vrot.lane.b32.xlu0 %v189, 126
        %v236 = vpop.permute.xlu0 %235
        %237 = vrot.lane.b32.xlu0 %v190, 126
        %v238 = vpop.permute.xlu0 %237
        %vm239 = vcmp.lt.s32.totalorder %v213, 126
        %v240 = vsel %vm239, %v236, %v238
        %v241 = vsel %vm239, %v234, %v236
        %v242 = vsel %vm239, %v238, %v234
        %v243 = vpack.c.bf16 %v241, %v241
        %v244 = vpack.c.bf16 %v240, %v240
        %v245 = vpack.c.bf16 %v242, %v242
        %v249 = vunpack.c.l.b16 %v243
        %v250 = vunpack.c.l.b16 %v244
        %v251 = vunpack.c.l.b16 %v245
        %v252 = vpack.c.b16 %v250, %v249
        %v253 = vpack.c.b16 %v251, %v251
        %256 = vst [vmem:[#allocation2 + $0x18] sm:$0xff] %v252
        %257 = vst [vmem:[#allocation2 + $0x20] sm:$0xf] %v253
        %258 = vrot.lane.b32.xlu0 %v188, 110
        %v259 = vpop.permute.xlu0 %258
        %260 = vrot.lane.b32.xlu0 %v189, 110
        %v261 = vpop.permute.xlu0 %260
        %262 = vrot.lane.b32.xlu0 %v190, 110
        %v263 = vpop.permute.xlu0 %262
        %vm264 = vcmp.lt.s32.totalorder %v213, 110
        %v265 = vsel %vm264, %v261, %v263
        %v266 = vsel %vm264, %v259, %v261
        %v267 = vsel %vm264, %v263, %v259
        %v268 = vpack.c.bf16 %v266, %v266
        %v269 = vpack.c.bf16 %v265, %v265
        %v270 = vpack.c.bf16 %v267, %v267
        %v274 = vunpack.c.l.b16 %v268
        %v275 = vunpack.c.l.b16 %v269
        %v276 = vunpack.c.l.b16 %v270
        %v277 = vpack.c.b16 %v275, %v274
        %v278 = vpack.c.b16 %v276, %v276
        %281 = vst [vmem:[#allocation2 + $0x24] sm:$0xff] %v277
        %282 = vst [vmem:[#allocation2 + $0x2c] sm:$0xf] %v278
        %283 = vrot.lane.b32.xlu0 %v188, 109
        %v284 = vpop.permute.xlu0 %283
        %285 = vrot.lane.b32.xlu0 %v189, 109
        %v286 = vpop.permute.xlu0 %285
        %287 = vrot.lane.b32.xlu0 %v190, 109
        %v288 = vpop.permute.xlu0 %287
        %vm289 = vcmp.lt.s32.totalorder %v213, 109
        %v290 = vsel %vm289, %v286, %v288
        %v291 = vsel %vm289, %v284, %v286
        %v292 = vsel %vm289, %v288, %v284
        %v293 = vpack.c.bf16 %v291, %v291
        %v294 = vpack.c.bf16 %v290, %v290
        %v295 = vpack.c.bf16 %v292, %v292
        %v299 = vunpack.c.l.b16 %v293
        %v300 = vunpack.c.l.b16 %v294
        %v301 = vunpack.c.l.b16 %v295
        %v302 = vpack.c.b16 %v300, %v299
        %v303 = vpack.c.b16 %v301, %v301
        %306 = vst [vmem:[#allocation2 + $0x30] sm:$0xff] %v302
        %307 = vst [vmem:[#allocation2 + $0x38] sm:$0xf] %v303
        %308 = vrot.lane.b32.xlu0 %v188, 108
        %v309 = vpop.permute.xlu0 %308
        %310 = vrot.lane.b32.xlu0 %v189, 108
        %v311 = vpop.permute.xlu0 %310
        %312 = vrot.lane.b32.xlu0 %v190, 108
        %v313 = vpop.permute.xlu0 %312
        %vm314 = vcmp.lt.s32.totalorder %v213, 108
        %v315 = vsel %vm314, %v311, %v313
        %v316 = vsel %vm314, %v309, %v311
        %v317 = vsel %vm314, %v313, %v309
        %v318 = vpack.c.bf16 %v316, %v316
        %v319 = vpack.c.bf16 %v315, %v315
        %v320 = vpack.c.bf16 %v317, %v317
        %v324 = vunpack.c.l.b16 %v318
        %v325 = vunpack.c.l.b16 %v319
        %v326 = vunpack.c.l.b16 %v320
        %v327 = vpack.c.b16 %v325, %v324
        %v328 = vpack.c.b16 %v326, %v326
        %331 = vst [vmem:[#allocation2 + $0x3c] sm:$0xff] %v327
        %332 = vst [vmem:[#allocation2 + $0x44] sm:$0xf] %v328
        %333 = vrot.lane.b32.xlu0 %v188, 92
        %v334 = vpop.permute.xlu0 %333
        %335 = vrot.lane.b32.xlu0 %v189, 92
        %v336 = vpop.permute.xlu0 %335
        %337 = vrot.lane.b32.xlu0 %v190, 92
        %v338 = vpop.permute.xlu0 %337
        %vm339 = vcmp.lt.s32.totalorder %v213, 92
        %v340 = vsel %vm339, %v336, %v338
        %v341 = vsel %vm339, %v334, %v336
        %v342 = vsel %vm339, %v338, %v334
        %v343 = vpack.c.bf16 %v341, %v341
        %v344 = vpack.c.bf16 %v340, %v340
        %v345 = vpack.c.bf16 %v342, %v342
        %v349 = vunpack.c.l.b16 %v343
        %v350 = vunpack.c.l.b16 %v344
        %v351 = vunpack.c.l.b16 %v345
        %v352 = vpack.c.b16 %v350, %v349
        %v353 = vpack.c.b16 %v351, %v351
        %356 = vst [vmem:[#allocation2 + $0x48] sm:$0xff] %v352
        %357 = vst [vmem:[#allocation2 + $0x50] sm:$0xf] %v353
        %358 = vrot.lane.b32.xlu0 %v188, 91
        %v359 = vpop.permute.xlu0 %358
        %360 = vrot.lane.b32.xlu0 %v189, 91
        %v361 = vpop.permute.xlu0 %360
        %362 = vrot.lane.b32.xlu0 %v190, 91
        %v363 = vpop.permute.xlu0 %362
        %vm364 = vcmp.lt.s32.totalorder %v213, 91
        %v365 = vsel %vm364, %v361, %v363
        %v366 = vsel %vm364, %v359, %v361
        %v367 = vsel %vm364, %v363, %v359
        %v368 = vpack.c.bf16 %v366, %v366
        %v369 = vpack.c.bf16 %v365, %v365
        %v370 = vpack.c.bf16 %v367, %v367
        %v374 = vunpack.c.l.b16 %v368
        %v375 = vunpack.c.l.b16 %v369
        %v376 = vunpack.c.l.b16 %v370
        %v377 = vpack.c.b16 %v375, %v374
        %v378 = vpack.c.b16 %v376, %v376
        %381 = vst [vmem:[#allocation2 + $0x54] sm:$0xff] %v377
        %382 = vst [vmem:[#allocation2 + $0x5c] sm:$0xf] %v378
        %383 = vrot.lane.b32.xlu0 %v188, 90
        %v384 = vpop.permute.xlu0 %383
        %385 = vrot.lane.b32.xlu0 %v189, 90
        %v386 = vpop.permute.xlu0 %385
        %387 = vrot.lane.b32.xlu0 %v190, 90
        %v388 = vpop.permute.xlu0 %387
        %vm389 = vcmp.lt.s32.totalorder %v213, 90
        %v390 = vsel %vm389, %v386, %v388
        %v391 = vsel %vm389, %v384, %v386
        %v392 = vsel %vm389, %v388, %v384
        %v393 = vpack.c.bf16 %v391, %v391
        %v394 = vpack.c.bf16 %v390, %v390
        %v395 = vpack.c.bf16 %v392, %v392
        %v399 = vunpack.c.l.b16 %v393
        %v400 = vunpack.c.l.b16 %v394
        %v401 = vunpack.c.l.b16 %v395
        %v402 = vpack.c.b16 %v400, %v399
        %v403 = vpack.c.b16 %v401, %v401
        %406 = vst [vmem:[#allocation2 + $0x60] sm:$0xff] %v402
        %407 = vst [vmem:[#allocation2 + $0x68] sm:$0xf] %v403
        %v408 = vld [vmem:[%s1] sm:$0xf]
        %v409 = vld [vmem:[#allocation2] sm:$0xff]
        %v410 = vld [vmem:[#allocation2 + $0x8] sm:$0xf]
        %v411 = vld [vmem:[#allocation2 + $0xc] sm:$0xff]
        %v412 = vld [vmem:[#allocation2 + $0x14] sm:$0xf]
        %v413 = vld [vmem:[#allocation2 + $0x18] sm:$0xff]
        %v414 = vld [vmem:[#allocation2 + $0x20] sm:$0xf]
        %v415 = vld [vmem:[#allocation2 + $0x24] sm:$0xff]
        %v416 = vld [vmem:[#allocation2 + $0x2c] sm:$0xf]
        %v417 = vld [vmem:[#allocation2 + $0x30] sm:$0xff]
        %v418 = vld [vmem:[#allocation2 + $0x38] sm:$0xf]
        %v419 = vld [vmem:[#allocation2 + $0x3c] sm:$0xff]
        %v420 = vld [vmem:[#allocation2 + $0x44] sm:$0xf]
        %v421 = vld [vmem:[#allocation2 + $0x48] sm:$0xff]
        %v422 = vld [vmem:[#allocation2 + $0x50] sm:$0xf]
        %v423 = vld [vmem:[#allocation2 + $0x54] sm:$0xff]
        %v424 = vld [vmem:[#allocation2 + $0x5c] sm:$0xf]
        %v425 = vld [vmem:[#allocation2 + $0x60] sm:$0xff]
        %v426 = vld [vmem:[#allocation2 + $0x68] sm:$0xf]
        %v427 = vld [vmem:[%s2] sm:$0xff]
        %429 = vset.pattern.permute.xlu0 0
        %430 = vperm.xlu0 %429, %v427
        %v431 = vpop.permute.xlu0 %430
        %v451 = vunpack.c.l.b16 %v409
        %v452 = vunpack.c.h.b16 %v409
        %v453 = vunpack.c.l.b16 %v410
        %v454 = vunpack.c.l.b16 %v411
        %v455 = vunpack.c.h.b16 %v411
        %v456 = vunpack.c.l.b16 %v412
        %v457 = vunpack.c.l.b16 %v413
        %v458 = vunpack.c.h.b16 %v413
        %v459 = vunpack.c.l.b16 %v414
        %v460 = vunpack.c.l.b16 %v415
        %v461 = vunpack.c.h.b16 %v415
        %v462 = vunpack.c.l.b16 %v416
        %v463 = vunpack.c.l.b16 %v417
        %v464 = vunpack.c.h.b16 %v417
        %v465 = vunpack.c.l.b16 %v418
        %v466 = vunpack.c.l.b16 %v419
        %v467 = vunpack.c.h.b16 %v419
        %v468 = vunpack.c.l.b16 %v420
        %v469 = vunpack.c.l.b16 %v421
        %v470 = vunpack.c.h.b16 %v421
        %v471 = vunpack.c.l.b16 %v422
        %v472 = vunpack.c.l.b16 %v423
        %v473 = vunpack.c.h.b16 %v423
        %v474 = vunpack.c.l.b16 %v424
        %v475 = vunpack.c.l.b16 %v425
        %v476 = vunpack.c.h.b16 %v425
        %v477 = vunpack.c.l.b16 %v426
        %v478 = vpack.c.b16 %v454, %v451
        %v479 = vpack.c.b16 %v455, %v452
        %v480 = vpack.c.b16 %v456, %v453
        %v481 = vpack.c.b16 %v460, %v457
        %v482 = vpack.c.b16 %v461, %v458
        %v483 = vpack.c.b16 %v462, %v459
        %v484 = vpack.c.b16 %v466, %v463
        %v485 = vpack.c.b16 %v467, %v464
        %v486 = vpack.c.b16 %v468, %v465
        %v487 = vpack.c.b16 %v472, %v469
        %v488 = vpack.c.b16 %v473, %v470
        %v489 = vpack.c.b16 %v474, %v471
        %v490 = vpack.c.b16 %v475, %v475
        %v491 = vpack.c.b16 %v476, %v476
        %v492 = vpack.c.b16 %v477, %v477
        %vm505 = vcmask 588800
        %v507 = vsel %vm505, %v408, 0
        %vm509 = vcmask 1043456
        %v511 = vsel %vm509, %v490, 0
        %v514 = vsel %vm509, %v491, 0
        %v517 = vsel %vm509, %v492, 0
        %519 = vmatprep.subr.bf16.mxu0 0
        %520 = vmatpush1.bf16.msra.mxu0 0
        %521 = vmatprep.subr.bf16.mxu0 0
        %522 = vmatpush1.bf16.msra.mxu0 0
        %523 = vmatprep.subr.bf16.mxu0 0
        %524 = vmatpush1.bf16.msra.mxu0 0
        %525 = vmatprep.subr.bf16.mxu0 %v514
        %526 = vmatpush1.bf16.msra.mxu0 %v511
        %527 = vmatprep.subr.bf16.mxu0 %v488
        %528 = vmatpush1.bf16.msra.mxu0 %v487
        %529 = vmatprep.subr.bf16.mxu0 %v485
        %530 = vmatpush1.bf16.msra.mxu0 %v484
        %531 = vmatprep.subr.bf16.mxu0 %v482
        %532 = vmatpush1.bf16.msra.mxu0 %v481
        %533 = vmatprep.subr.bf16.mxu0 %v479
        %534 = vmatpush1.bf16.msra.mxu0 %v478
        %535 = vmatprep.subr.bf16.mxu0 0
        %536 = vmatpush2.bf16.msra.mxu0 0
        %537 = vmatprep.subr.bf16.mxu0 0
        %538 = vmatpush2.bf16.msra.mxu0 0
        %539 = vmatprep.subr.bf16.mxu0 0
        %540 = vmatpush2.bf16.msra.mxu0 0
        %541 = vmatprep.subr.bf16.mxu0 0
        %542 = vmatpush2.bf16.msra.mxu0 0
        %543 = vmatprep.subr.bf16.mxu0 0
        %544 = vmatpush2.bf16.msra.mxu0 0
        %545 = vmatprep.subr.bf16.mxu0 0
        %546 = vmatpush2.bf16.msra.mxu0 0
        %547 = vmatprep.subr.bf16.mxu0 0
        %548 = vmatpush2.bf16.msra.mxu0 0
        %549 = vmatprep.subr.bf16.mxu0 0
        %550 = vmatpush2.bf16.msra.mxu0 0
        %551 = vmatprep.mubr.bf16.mxu0 0
        %552 = vmatmul.mubr.bf16.gmra.mxu0 %v507
        %v553 = vpop.f32.mrf.mxu0
        %v554 = vadd.f32 %v431, %v553
        %v555 = vpop.f32.mrf.mxu0
        %v556 = vadd.f32 %v431, %v555
        %v557 = vpop.f32.mrf.mxu0
        %v558 = vpop.f32.mrf.mxu0
        %559 = vdwg.mxu0
        %560 = vmatprep.subr.bf16.mxu0 0
        %561 = vmatpush1.bf16.msra.mxu0 0
        %562 = vmatprep.subr.bf16.mxu0 0
        %563 = vmatpush1.bf16.msra.mxu0 0
        %564 = vmatprep.subr.bf16.mxu0 0
        %565 = vmatpush1.bf16.msra.mxu0 0
        %566 = vmatprep.subr.bf16.mxu0 0
        %567 = vmatpush1.bf16.msra.mxu0 %v517
        %568 = vmatprep.subr.bf16.mxu0 0
        %569 = vmatpush1.bf16.msra.mxu0 %v489
        %570 = vmatprep.subr.bf16.mxu0 0
        %571 = vmatpush1.bf16.msra.mxu0 %v486
        %572 = vmatprep.subr.bf16.mxu0 0
        %573 = vmatpush1.bf16.msra.mxu0 %v483
        %574 = vmatprep.subr.bf16.mxu0 0
        %575 = vmatpush1.bf16.msra.mxu0 %v480
        %576 = vmatprep.subr.bf16.mxu0 0
        %577 = vmatpush2.bf16.msra.mxu0 0
        %578 = vmatprep.subr.bf16.mxu0 0
        %579 = vmatpush2.bf16.msra.mxu0 0
        %580 = vmatprep.subr.bf16.mxu0 0
        %581 = vmatpush2.bf16.msra.mxu0 0
        %582 = vmatprep.subr.bf16.mxu0 0
        %583 = vmatpush2.bf16.msra.mxu0 0
        %584 = vmatprep.subr.bf16.mxu0 0
        %585 = vmatpush2.bf16.msra.mxu0 0
        %586 = vmatprep.subr.bf16.mxu0 0
        %587 = vmatpush2.bf16.msra.mxu0 0
        %588 = vmatprep.subr.bf16.mxu0 0
        %589 = vmatpush2.bf16.msra.mxu0 0
        %590 = vmatprep.subr.bf16.mxu0 0
        %591 = vmatpush2.bf16.msra.mxu0 0
        %592 = vmatprep.mubr.bf16.mxu0 0
        %593 = vmatmul.mubr.bf16.gmra.mxu0 %v507
        %v594 = vpop.f32.mrf.mxu0
        %v595 = vadd.f32 %v431, %v594
        %v596 = vpop.f32.mrf.mxu0
        %v597 = vpop.f32.mrf.mxu0
        %v598 = vpop.f32.mrf.mxu0
        %599 = vdwg.mxu0
        %600 = vst [vmem:[%s186] sm:$0xff] %v554
        %601 = vst [vmem:[%s186 + $0x8] sm:$0xff] %v556
        %602 = vst [vmem:[%s186 + $0x10] sm:$0xff] %v595
        %s603 = sand.u32 %s96, 1
        %s604 = scalar_lea.sflag [#allocation5], %s603
        %s605 = sand.u32 %s96, 1
        %s606 = smul.addr %s605, 24
        %s607 = scalar_lea.vmem [#allocation6], %s606
        // Predicated region
        $region37: #{tpu_custom_call.1} parent=31 // pred_check
          %p608 = pneg %p106
        $region38: #{tpu_custom_call.1} parent=31 // pred_check_branch
          %610 = sbr.rel (%p608) target = $region40
        $region39: #{tpu_custom_call.1} parent=31 // pred_region
          %s612 = ssub.s32 384, 384
          %613 = vsyncadd %s604, %s612
          %s614 = smul.addr %s20, 3
          %s615 = smul.addr %s614, 128
          %s616 = scalar_lea.hbm %s3, %s615
          %s618 = sshll.u32 %s607, 4
          %s619 = int_to_ptr.vmem [resolvable:$true] %s618
          %621 = dma.vmem_to_hbm [thread:$0]  %s619, 384, %s616, %s604
        $region40: #{tpu_custom_call.1} parent=31 // pred_fallthru
          _
      $region32: #{tpu_custom_call.1} parent=5 // pred_fallthru
        _
      %p622 = scmp.le.s32.totalorder 2, %s15
      // Predicated region
      $region41: #{tpu_custom_call.1} parent=5 // pred_check
        %p623 = pneg %p622
      $region42: #{tpu_custom_call.1} parent=5 // pred_check_branch
        %625 = sbr.rel (%p623) target = $region44
      $region43: #{tpu_custom_call.1} parent=5 // pred_region
        %s626 = ssub.s32 %s15, 2
        // Predicated region
        $region45: #{tpu_custom_call.1} parent=43 // pred_check
          %p627 = pneg %p112
        $region46: #{tpu_custom_call.1} parent=43 // pred_check_branch
          %629 = sbr.rel (%p627) target = $region48
        $region47: #{tpu_custom_call.1} parent=43 // pred_region
          %s630 = sand.u32 %s97, 1
          %s631 = scalar_lea.sflag [#allocation5], %s630
          %s632 = sand.u32 %s97, 1
          %s633 = smul.addr %s632, 24
          %s634 = scalar_lea.vmem [#allocation6], %s633
          %635 = dma.done %s631, 384
        $region48: #{tpu_custom_call.1} parent=43 // pred_fallthru
          _
      $region44: #{tpu_custom_call.1} parent=5 // pred_fallthru
        _
    $region6: #{tpu_custom_call.1} parent=1 // loop_footer
      %s19 = sadd.s32 1, %s15
    $region7: #{tpu_custom_call.1} parent=1 // loop_footer_branch
      %14 = sbr.rel target = $region3
    $region8: #{tpu_custom_call.1} parent=1 // loop_exit
      _
    %636 = vsyncpa [#allocation4], 1
    %s637 = scalar_lea.sflag [#allocation4], 1
    %638 = vsyncpa %s637, 1
    %639 = vsyncpa [#allocation5], 1
    %s640 = scalar_lea.sflag [#allocation5], 1
    %641 = vsyncpa %s640, 1

</llo_original>
